<compile_context>
chip_gen: v7x
topology: tpu7x:2x2x1
jax: 0.10.0
libtpu: 0.0.40
codegen_flags: <defaults>
</compile_context>

<pallas_src>
import math

import jax
import jax.numpy as jnp
from jax.experimental import pallas as pl
from jax.experimental.pallas import tpu as pltpu


def _flatten_dma_kernel(x_hbm_ref, o_hbm_ref, sem):
    # One DMA for the whole (already flattened) array: HBM -> HBM directly,
    # no VMEM staging, no vreg traffic, no per-tile overhead.
    cp = pltpu.make_async_copy(x_hbm_ref, o_hbm_ref, sem)
    cp.start()
    cp.wait()


def pallas_flatten(x, *, materialize=True):
    """Equivalent of `x.view(x.size(0), -1)` for an arbitrary-rank input.

    materialize=False : metadata-only reshape (fastest; no kernel, no HBM I/O).
    materialize=True  : force an explicit copy via a single HBM->HBM Pallas DMA.
    """
    n = x.shape[0]
    d = math.prod(x.shape[1:]) if x.ndim > 1 else 1

    # Row-major collapse of the trailing dims == torch .view(N, -1) on a
    # contiguous tensor.  Zero-copy for contiguous inputs; if x came from a
    # transpose, XLA inserts the necessary copy before the pallas_call.
    x2 = x.reshape(n, d)

    if not materialize:
        return x2

    return pl.pallas_call(
        _flatten_dma_kernel,
        out_shape=jax.ShapeDtypeStruct((n, d), x.dtype),
        # pl.ANY => kernel receives raw HBM refs; the body DMAs them directly.
        in_specs=[pl.BlockSpec(memory_space=pl.ANY)],
        out_specs=pl.BlockSpec(memory_space=pl.ANY),
        scratch_shapes=[pltpu.SemaphoreType.DMA],
    )(x2)


if __name__ == "__main__":
    key = jax.random.PRNGKey(0)
    # Small NCHW input, as the PyTorch module would typically see.
    x = jax.random.normal(key, (2, 4, 16, 16), jnp.float32)

    flatten = jax.jit(pallas_flatten)
    out = jax.block_until_ready(flatten(x))

    ref = x.reshape(x.shape[0], -1)  # torch: x.view(x.size(0), -1)
    assert out.shape == (2, 4 * 16 * 16), out.shape
    assert out.dtype == x.dtype
    assert bool(jnp.all(out == ref))

    # Also exercise the metadata-only fast path (the recommended production
    # formulation) and check it agrees.
    out_view = jax.block_until_ready(
        jax.jit(lambda a: pallas_flatten(a, materialize=False))(x))
    assert out_view.shape == ref.shape
    assert bool(jnp.all(out_view == ref))

    print("KERNEL_OK")
</pallas_src>

<mosaic_0001>
module attributes {stable_mosaic.version = 11 : i64} {
  func.func @_flatten_dma_kernel(%arg0: memref<2x1024xf32, #tpu.memory_space<any>>, %arg1: memref<2x1024xf32, #tpu.memory_space<any>>, %arg2: memref<!tpu.dma_semaphore, #tpu.memory_space<semaphore_mem>>) attributes {dimension_semantics = [], scalar_prefetch = 0 : i64, scratch_operands = 1 : i64, tpu.core_type = #tpu.core_type<tc>} {
    tpu.enqueue_dma source(%arg0 : memref<2x1024xf32, #tpu.memory_space<any>>) target(%arg1 : memref<2x1024xf32, #tpu.memory_space<any>>) target_semaphore(%arg2 : memref<!tpu.dma_semaphore, #tpu.memory_space<semaphore_mem>>)
    tpu.wait_dma2 semaphore(%arg2 : memref<!tpu.dma_semaphore, #tpu.memory_space<semaphore_mem>>) src(%arg0 : memref<2x1024xf32, #tpu.memory_space<any>>) dst(%arg1 : memref<2x1024xf32, #tpu.memory_space<any>>)
    return
  }
}

</mosaic_0001>

<llo_original>
// kernel: pallas_flatten.1
$region0: #{pallas_flatten.1}
  #allocation0 [shape = 'u32[]', space=smem, size = 0x4, offset = 0x4, fixed_abs, tag = 'smem constant byte address 0x4 - core index']
  #allocation1 [shape = 'u32[144,128]{1,0:T(1,128)}', space=vmem, size = 0x12000, scoped, tag = 'internal scratch']
  #allocation2 [shape = 's32[1]{0}', space=sflag, size = 0x4, scoped, tag = 'scratch operand']
  #allocation3 [shape = 's32[]', space=sflag, size = 0x4, offset = 0, fixed_abs, tag = 'sflag constant byte address 0x0 - dummy sync flag']
  #allocation4 [shape = 's32[]', space=sflag, size = 0x4, offset = 0, fixed_abs, tag = 'sflag constant byte address 0x0 - dummy sync flag']
  #allocation5 [shape = 'u32[]', space=smem, size = 0x4, offset = 0x44, fixed_abs, tag = 'smem constant byte address 0x44 - assertion arg 0']
  #allocation6 [shape = 'u32[]', space=smem, size = 0x4, offset = 0x48, fixed_abs, tag = 'smem constant byte address 0x48 - assertion arg 1']
  %s0 = inlined_call_operand.vmem [shape: f32[2,1024], index: 0, kind: input, shape index: {}]
  %s1 = inlined_call_operand.hbm [shape: f32[2,1024], index: 1, kind: output, shape index: {}]
  %s2 = sld [smem:[#allocation0]]
  $region6: #{pallas_flatten.1} parent=0
    _
  %s4 = ssub.s32 1, %s2
  %s5 = scalar_select 0, %s4, %s2
  // Predicated region
  $region2: #{pallas_flatten.1} parent=0 // pred_check
    _
  $region3: #{pallas_flatten.1} parent=0 // pred_check_branch
    %7 = sbr.rel target = $region5
  $region4: #{pallas_flatten.1} parent=0 // pred_region
    %8 = sst [smem:[#allocation5]] [#allocation4]
    %9 = sst [smem:[#allocation6]] [#allocation3]
  $region5: #{pallas_flatten.1} parent=0 // pred_fallthru
    _
  %11 = shalt.err (0)
  %s13 = sshll.u32 %s0, 4
  %s14 = int_to_ptr.vmem [resolvable:$true] %s13
  %16 = dma.vmem_to_hbm [thread:$0]  %s14, 256, %s1, [#allocation2]
  %s17 = smul.u32 2, 1
  %s18 = smul.u32 %s17, 8
  %s19 = sshll.u32 %s18, 4
  %20 = dma.done [#allocation2], %s19
  %21 = vsyncmov [#allocation2]
  %s22 = vpop.sfrf %21
  %p23 = scmp.eq.s32.totalorder %s22, 0
  %p24 = pneg %p23
  %26 = shalt.err (%p24)

</llo_original>
